<compile_context>
chip_gen: v7x
topology: tpu7x:2x2x1
jax: 0.10.0
libtpu: 0.0.40
codegen_flags: <defaults>
</compile_context>

<pallas_src>
import functools

import jax
import jax.numpy as jnp
from jax.experimental import pallas as pl
from jax.experimental.pallas import tpu as pltpu


def _round_up(x, m):
    return ((x + m - 1) // m) * m


def mlp_kernel(x_ref, w1_ref, b1_ref, w2_ref, b2_ref, w3_ref, b3_ref, o_ref):
    # x tile -> bf16 for the MXU (no-op if the caller already passed bf16); accumulate in f32.
    x = x_ref[...].astype(jnp.bfloat16)

    # fc1 + ReLU  (dropout1 = identity in eval)
    h1 = jnp.dot(x, w1_ref[...], preferred_element_type=jnp.float32) + b1_ref[...]
    h1 = jnp.maximum(h1, 0.0).astype(jnp.bfloat16)

    # fc2 + ReLU  (dropout2 = identity in eval)
    h2 = jnp.dot(h1, w2_ref[...], preferred_element_type=jnp.float32) + b2_ref[...]
    h2 = jnp.maximum(h2, 0.0).astype(jnp.bfloat16)

    # fc3 (logits, no activation) — output is lane-padded to a multiple of 128
    out = jnp.dot(h2, w3_ref[...], preferred_element_type=jnp.float32) + b3_ref[...]
    o_ref[...] = out.astype(o_ref.dtype)


def _dimension_semantics(grid0):
    """Batch axis semantics: shard across the two TensorCores on v7x, plain parallel elsewhere."""
    try:
        kind = jax.devices()[0].device_kind.lower()
    except Exception:  # pragma: no cover - defensive; keeps tracing robust
        kind = ""
    if "v7" in kind and grid0 % 2 == 0:
        return (pltpu.CORE_PARALLEL,)
    return ("parallel",)


@functools.partial(jax.jit, static_argnames=("tile_b", "padded_output", "out_dtype"))
def neural_net_forward(x, params, *, tile_b=512, padded_output=False, out_dtype=jnp.float32):
    """Forward pass.

    x: (B, input_size), float32 or bfloat16 (bf16 halves the dominant HBM input stream at large B).
    params: dict of (in, out) weights and (1, out) biases (float32).
    padded_output=True returns the lane-padded (B, round_up(num_classes, 128)) logits so a fused
    consumer can do the class-dim slice itself; default returns (B, num_classes).
    """
    assert tile_b % 8 == 0, "tile_b must be sublane-aligned (multiple of 8)"
    B, input_size = x.shape
    num_classes = params["w3"].shape[1]
    hidden1 = params["w1"].shape[1]
    hidden2 = params["w2"].shape[1]

    # bf16 weights for the matmuls; biases stay f32 (added to the f32 accumulators).
    w1 = params["w1"].astype(jnp.bfloat16)
    w2 = params["w2"].astype(jnp.bfloat16)
    b1 = params["b1"].astype(jnp.float32)
    b2 = params["b2"].astype(jnp.float32)

    # Lane-pad fc3 to a dense 128-multiple output width (unmasked vst on the output stream).
    n_pad = max(128, _round_up(num_classes, 128))
    w3 = jnp.zeros((hidden2, n_pad), jnp.bfloat16).at[:, :num_classes].set(
        params["w3"].astype(jnp.bfloat16))
    b3 = jnp.zeros((1, n_pad), jnp.float32).at[:, :num_classes].set(
        params["b3"].astype(jnp.float32))

    # Batch tiling without any jnp.pad:
    #  * B <= tile_b: one exact-size tile (block == full dim is always a legal block shape)
    #  * B  > tile_b: tile_b-row tiles; Pallas masks the ragged last tile's out-of-bounds writes.
    tb = B if B <= tile_b else tile_b
    grid = (pl.cdiv(B, tb),)

    resident = lambda a: pl.BlockSpec(a.shape, lambda i: (0,) * a.ndim)  # DMA'd once, stays in VMEM

    flops = 2 * B * (input_size * hidden1 + hidden1 * hidden2 + hidden2 * n_pad)
    bytes_accessed = (
        x.size * x.dtype.itemsize
        + sum(a.size * a.dtype.itemsize for a in (w1, b1, w2, b2, w3, b3))
        + B * n_pad * jnp.dtype(out_dtype).itemsize
    )

    out = pl.pallas_call(
        mlp_kernel,
        out_shape=jax.ShapeDtypeStruct((B, n_pad), out_dtype),
        grid=grid,
        in_specs=[
            pl.BlockSpec((tb, input_size), lambda i: (i, 0)),  # x: tiled over batch
            resident(w1), resident(b1),
            resident(w2), resident(b2),
            resident(w3), resident(b3),
        ],
        out_specs=pl.BlockSpec((tb, n_pad), lambda i: (i, 0)),
        compiler_params=pltpu.CompilerParams(dimension_semantics=_dimension_semantics(grid[0])),
        cost_estimate=pl.CostEstimate(
            flops=flops, transcendentals=0, bytes_accessed=bytes_accessed),
    )(x, w1, b1, w2, b2, w3, b3)

    if padded_output:
        return out  # (B, n_pad); columns >= num_classes are bias-free zero-weight logits (== 0 + 0)
    return out[:, :num_classes]


def init_params(key, input_size, num_classes):
    """Deterministic init mimicking torch.nn.Linear default (uniform(-1/sqrt(fan_in), 1/sqrt(fan_in)))."""
    dims = [(input_size, 512), (512, 256), (256, num_classes)]
    params = {}
    keys = jax.random.split(key, 2 * len(dims))
    for i, (fan_in, fan_out) in enumerate(dims):
        bound = 1.0 / jnp.sqrt(fan_in)
        params[f"w{i+1}"] = jax.random.uniform(
            keys[2 * i], (fan_in, fan_out), jnp.float32, -bound, bound)
        params[f"b{i+1}"] = jax.random.uniform(
            keys[2 * i + 1], (1, fan_out), jnp.float32, -bound, bound)
    return params


def reference_forward(x, params):
    h1 = jnp.maximum(x @ params["w1"] + params["b1"], 0.0)
    h2 = jnp.maximum(h1 @ params["w2"] + params["b2"], 0.0)
    return h2 @ params["w3"] + params["b3"]


if __name__ == "__main__":
    key = jax.random.PRNGKey(0)
    k_x, k_p = jax.random.split(key)

    batch = 8
    input_size = 256
    num_classes = 10

    x = jax.random.normal(k_x, (batch, input_size), dtype=jnp.float32)
    params = init_params(k_p, input_size, num_classes)

    out = neural_net_forward(x, params)
    out = jax.block_until_ready(out)

    ref = reference_forward(x, params)
    assert out.shape == (batch, num_classes), out.shape
    # bf16 matmul path: expect ~1e-2-level relative error vs the f32 reference.
    assert jnp.allclose(out, ref, atol=5e-2, rtol=5e-2), "mismatch vs JAX reference"

    # Exercise the padded-output fast path (consumer-side slice) as well.
    out_padded = jax.block_until_ready(neural_net_forward(x, params, padded_output=True))
    assert out_padded.shape[0] == batch and out_padded.shape[1] % 128 == 0
    assert jnp.allclose(out_padded[:, :num_classes], ref, atol=5e-2, rtol=5e-2)

    print("KERNEL_OK")
</pallas_src>

<mosaic_0001>
module attributes {stable_mosaic.version = 11 : i64} {
  func.func @mlp_kernel(%arg0: i32, %arg1: memref<8x256xf32, #tpu.memory_space<vmem>>, %arg2: memref<256x512xbf16, #tpu.memory_space<vmem>>, %arg3: memref<1x512xf32, #tpu.memory_space<vmem>>, %arg4: memref<512x256xbf16, #tpu.memory_space<vmem>>, %arg5: memref<1x256xf32, #tpu.memory_space<vmem>>, %arg6: memref<256x128xbf16, #tpu.memory_space<vmem>>, %arg7: memref<1x128xf32, #tpu.memory_space<vmem>>, %arg8: memref<8x128xf32, #tpu.memory_space<vmem>>) attributes {dimension_semantics = [#tpu.dimension_semantics<parallel>], iteration_bounds = array<i64: 1>, scalar_prefetch = 0 : i64, scratch_operands = 0 : i64, tpu.core_type = #tpu.core_type<tc>, window_params = [{transform_indices = @transform_0, window_bounds = array<i64: 8, 256>}, {pipeline_mode = #tpu.pipeline_mode<synchronous>, transform_indices = @transform_1, window_bounds = array<i64: 256, 512>}, {pipeline_mode = #tpu.pipeline_mode<synchronous>, transform_indices = @transform_2, window_bounds = array<i64: 1, 512>}, {pipeline_mode = #tpu.pipeline_mode<synchronous>, transform_indices = @transform_3, window_bounds = array<i64: 512, 256>}, {pipeline_mode = #tpu.pipeline_mode<synchronous>, transform_indices = @transform_4, window_bounds = array<i64: 1, 256>}, {pipeline_mode = #tpu.pipeline_mode<synchronous>, transform_indices = @transform_5, window_bounds = array<i64: 256, 128>}, {pipeline_mode = #tpu.pipeline_mode<synchronous>, transform_indices = @transform_6, window_bounds = array<i64: 1, 128>}, {transform_indices = @transform_7, window_bounds = array<i64: 8, 128>}]} {
    %c0 = arith.constant 0 : index
    %c0_0 = arith.constant 0 : index
    %0 = vector.load %arg1[%c0, %c0_0] : memref<8x256xf32, #tpu.memory_space<vmem>>, vector<8x256xf32>
    %1 = arith.truncf %0 : vector<8x256xf32> to vector<8x256xbf16>
    %c0_1 = arith.constant 0 : index
    %c0_2 = arith.constant 0 : index
    %2 = vector.load %arg2[%c0_1, %c0_2] : memref<256x512xbf16, #tpu.memory_space<vmem>>, vector<256x512xbf16>
    %cst = arith.constant dense<0.000000e+00> : vector<8x512xf32>
    %3 = tpu.matmul %1, %2, %cst {dimension_numbers = #tpu.dot_dimension_numbers<[1], [0], [0], [1], [0, 0, 1, 1], [], []>} : vector<8x256xbf16>, vector<256x512xbf16>, vector<8x512xf32> -> vector<8x512xf32>
    %c0_3 = arith.constant 0 : index
    %c0_4 = arith.constant 0 : index
    %4 = vector.load %arg3[%c0_3, %c0_4] : memref<1x512xf32, #tpu.memory_space<vmem>>, vector<1x512xf32>
    %5 = vector.broadcast %4 : vector<1x512xf32> to vector<8x512xf32>
    %6 = arith.addf %3, %5 : vector<8x512xf32>
    %cst_5 = arith.constant 0.000000e+00 : f32
    %7 = vector.broadcast %cst_5 : f32 to vector<8x512xf32>
    %8 = arith.maximumf %6, %7 : vector<8x512xf32>
    %9 = arith.truncf %8 : vector<8x512xf32> to vector<8x512xbf16>
    %c0_6 = arith.constant 0 : index
    %c0_7 = arith.constant 0 : index
    %10 = vector.load %arg4[%c0_6, %c0_7] : memref<512x256xbf16, #tpu.memory_space<vmem>>, vector<512x256xbf16>
    %cst_8 = arith.constant dense<0.000000e+00> : vector<8x256xf32>
    %11 = tpu.matmul %9, %10, %cst_8 {dimension_numbers = #tpu.dot_dimension_numbers<[1], [0], [0], [1], [0, 0, 1, 1], [], []>} : vector<8x512xbf16>, vector<512x256xbf16>, vector<8x256xf32> -> vector<8x256xf32>
    %c0_9 = arith.constant 0 : index
    %c0_10 = arith.constant 0 : index
    %12 = vector.load %arg5[%c0_9, %c0_10] : memref<1x256xf32, #tpu.memory_space<vmem>>, vector<1x256xf32>
    %13 = vector.broadcast %12 : vector<1x256xf32> to vector<8x256xf32>
    %14 = arith.addf %11, %13 : vector<8x256xf32>
    %cst_11 = arith.constant 0.000000e+00 : f32
    %15 = vector.broadcast %cst_11 : f32 to vector<8x256xf32>
    %16 = arith.maximumf %14, %15 : vector<8x256xf32>
    %17 = arith.truncf %16 : vector<8x256xf32> to vector<8x256xbf16>
    %c0_12 = arith.constant 0 : index
    %c0_13 = arith.constant 0 : index
    %18 = vector.load %arg6[%c0_12, %c0_13] : memref<256x128xbf16, #tpu.memory_space<vmem>>, vector<256x128xbf16>
    %cst_14 = arith.constant dense<0.000000e+00> : vector<8x128xf32>
    %19 = tpu.matmul %17, %18, %cst_14 {dimension_numbers = #tpu.dot_dimension_numbers<[1], [0], [0], [1], [0, 0, 1, 1], [], []>} : vector<8x256xbf16>, vector<256x128xbf16>, vector<8x128xf32> -> vector<8x128xf32>
    %c0_15 = arith.constant 0 : index
    %c0_16 = arith.constant 0 : index
    %20 = vector.load %arg7[%c0_15, %c0_16] : memref<1x128xf32, #tpu.memory_space<vmem>>, vector<1x128xf32>
    %21 = vector.broadcast %20 : vector<1x128xf32> to vector<8x128xf32>
    %22 = arith.addf %19, %21 : vector<8x128xf32>
    %c0_17 = arith.constant 0 : index
    %c0_18 = arith.constant 0 : index
    %23 = vector.load %arg8[%c0_17, %c0_18] : memref<8x128xf32, #tpu.memory_space<vmem>>, vector<8x128xf32>
    tpu.vector_store %arg8[%c0_17, %c0_18], %22 {strides = array<i32>} : memref<8x128xf32, #tpu.memory_space<vmem>>, vector<8x128xf32>,
    return
  }
  func.func @transform_0(%arg0: i32) -> (i32, i32) {
    %c0_i32 = arith.constant 0 : i32
    %c0_i32_0 = arith.constant 0 : i32
    return %arg0, %c0_i32 : i32, i32
  }
  func.func @transform_1(%arg0: i32) -> (i32, i32) {
    %c0_i32 = arith.constant 0 : i32
    %c0_i32_0 = arith.constant 0 : i32
    %c0_i32_1 = arith.constant 0 : i32
    return %c0_i32, %c0_i32_0 : i32, i32
  }
  func.func @transform_2(%arg0: i32) -> (i32, i32) {
    %c0_i32 = arith.constant 0 : i32
    %c0_i32_0 = arith.constant 0 : i32
    %c0_i32_1 = arith.constant 0 : i32
    return %c0_i32, %c0_i32_0 : i32, i32
  }
  func.func @transform_3(%arg0: i32) -> (i32, i32) {
    %c0_i32 = arith.constant 0 : i32
    %c0_i32_0 = arith.constant 0 : i32
    %c0_i32_1 = arith.constant 0 : i32
    return %c0_i32, %c0_i32_0 : i32, i32
  }
  func.func @transform_4(%arg0: i32) -> (i32, i32) {
    %c0_i32 = arith.constant 0 : i32
    %c0_i32_0 = arith.constant 0 : i32
    %c0_i32_1 = arith.constant 0 : i32
    return %c0_i32, %c0_i32_0 : i32, i32
  }
  func.func @transform_5(%arg0: i32) -> (i32, i32) {
    %c0_i32 = arith.constant 0 : i32
    %c0_i32_0 = arith.constant 0 : i32
    %c0_i32_1 = arith.constant 0 : i32
    return %c0_i32, %c0_i32_0 : i32, i32
  }
  func.func @transform_6(%arg0: i32) -> (i32, i32) {
    %c0_i32 = arith.constant 0 : i32
    %c0_i32_0 = arith.constant 0 : i32
    %c0_i32_1 = arith.constant 0 : i32
    return %c0_i32, %c0_i32_0 : i32, i32
  }
  func.func @transform_7(%arg0: i32) -> (i32, i32) {
    %c0_i32 = arith.constant 0 : i32
    %c0_i32_0 = arith.constant 0 : i32
    return %arg0, %c0_i32 : i32, i32
  }
}

</mosaic_0001>

<llo_original>
// kernel: neural_net_forward.1
$region0: #{neural_net_forward.1}
  #allocation0 [shape = 'u32[]', space=smem, size = 0x4, offset = 0x4, fixed_abs, tag = 'smem constant byte address 0x4 - core index']
  #allocation1 [shape = 'u32[144,128]{1,0:T(1,128)}', space=vmem, size = 0x12000, scoped, tag = 'internal scratch']
  %s0 = inlined_call_operand.vmem [shape: f32[8,256], index: 0, kind: input, shape index: {}]
  %s1 = inlined_call_operand.vmem [shape: bf16[256,512], index: 1, kind: input, shape index: {}]
  %s2 = inlined_call_operand.vmem [shape: f32[1,512], index: 2, kind: input, shape index: {}]
  %s3 = inlined_call_operand.vmem [shape: bf16[512,256], index: 3, kind: input, shape index: {}]
  %s4 = inlined_call_operand.vmem [shape: f32[1,256], index: 4, kind: input, shape index: {}]
  %s5 = inlined_call_operand.vmem [shape: bf16[256,128], index: 5, kind: input, shape index: {}]
  %s6 = inlined_call_operand.vmem [shape: f32[1,128], index: 6, kind: input, shape index: {}]
  %s7 = inlined_call_operand.hbm [shape: f32[8,128], index: 7, kind: output, shape index: {}]
  %s8 = sld [smem:[#allocation0]]
  $region38: #{neural_net_forward.1} parent=0
    _
  %s10 = ssub.s32 1, %s8
  %s11 = scalar_select 0, %s10, %s8
  $region1: #{neural_net_forward.1} parent=0
    #allocation2 [shape = 'u8[4096]{0}', space=vmem, size = 0x1000, scoped, tag = 'output window, operand 0, single buffered']
    #allocation3 [shape = 's32[1]{0}', space=sflag, size = 0x4, scoped, tag = 'scoped memory for neural_net_forward.1']
    %12 = vsyncpa [#allocation3], 0
    // Predicated region
    $region2: #{neural_net_forward.1} parent=1 // pred_check
      _
    $region3: #{neural_net_forward.1} parent=1 // pred_check_branch
      %14 = sbr.rel (0) target = $region5
    $region4: #{neural_net_forward.1} parent=1 // pred_region
      _
    $region5: #{neural_net_forward.1} parent=1 // pred_fallthru
      _
    // Predicated region
    $region6: #{neural_net_forward.1} parent=1 // pred_check
      _
    $region7: #{neural_net_forward.1} parent=1 // pred_check_branch
      %16 = sbr.rel (0) target = $region9
    $region8: #{neural_net_forward.1} parent=1 // pred_region
      _
    $region9: #{neural_net_forward.1} parent=1 // pred_fallthru
      _
    // Predicated region
    $region10: #{neural_net_forward.1} parent=1 // pred_check
      _
    $region11: #{neural_net_forward.1} parent=1 // pred_check_branch
      %18 = sbr.rel (0) target = $region13
    $region12: #{neural_net_forward.1} parent=1 // pred_region
      _
    $region13: #{neural_net_forward.1} parent=1 // pred_fallthru
      _
    // Predicated region
    $region14: #{neural_net_forward.1} parent=1 // pred_check
      _
    $region15: #{neural_net_forward.1} parent=1 // pred_check_branch
      %20 = sbr.rel (0) target = $region17
    $region16: #{neural_net_forward.1} parent=1 // pred_region
      _
    $region17: #{neural_net_forward.1} parent=1 // pred_fallthru
      _
    // Predicated region
    $region18: #{neural_net_forward.1} parent=1 // pred_check
      _
    $region19: #{neural_net_forward.1} parent=1 // pred_check_branch
      %22 = sbr.rel (0) target = $region21
    $region20: #{neural_net_forward.1} parent=1 // pred_region
      _
    $region21: #{neural_net_forward.1} parent=1 // pred_fallthru
      _
    // Predicated region
    $region22: #{neural_net_forward.1} parent=1 // pred_check
      _
    $region23: #{neural_net_forward.1} parent=1 // pred_check_branch
      %24 = sbr.rel (0) target = $region25
    $region24: #{neural_net_forward.1} parent=1 // pred_region
      _
    $region25: #{neural_net_forward.1} parent=1 // pred_fallthru
      _
    // Predicated region
    $region26: #{neural_net_forward.1} parent=1 // pred_check
      _
    $region27: #{neural_net_forward.1} parent=1 // pred_check_branch
      %26 = sbr.rel (0) target = $region29
    $region28: #{neural_net_forward.1} parent=1 // pred_region
      _
    $region29: #{neural_net_forward.1} parent=1 // pred_fallthru
      _
    %v28 = vld [vmem:[%s0] sm:$0xff]
    %v29 = vld [vmem:[%s0 + $0x8] sm:$0xff]
    %v30 = vpack.c.bf16 %v28, %v28
    %v31 = vpack.c.bf16 %v29, %v29
    %v32 = vld [vmem:[%s1] sm:$0xff]
    %v33 = vld [vmem:[%s1 + $0x8] sm:$0xff]
    %v34 = vld [vmem:[%s1 + $0x10] sm:$0xff]
    %v35 = vld [vmem:[%s1 + $0x18] sm:$0xff]
    %v36 = vld [vmem:[%s1 + $0x20] sm:$0xff]
    %v37 = vld [vmem:[%s1 + $0x28] sm:$0xff]
    %v38 = vld [vmem:[%s1 + $0x30] sm:$0xff]
    %v39 = vld [vmem:[%s1 + $0x38] sm:$0xff]
    %v40 = vld [vmem:[%s1 + $0x40] sm:$0xff]
    %v41 = vld [vmem:[%s1 + $0x48] sm:$0xff]
    %v42 = vld [vmem:[%s1 + $0x50] sm:$0xff]
    %v43 = vld [vmem:[%s1 + $0x58] sm:$0xff]
    %v44 = vld [vmem:[%s1 + $0x60] sm:$0xff]
    %v45 = vld [vmem:[%s1 + $0x68] sm:$0xff]
    %v46 = vld [vmem:[%s1 + $0x70] sm:$0xff]
    %v47 = vld [vmem:[%s1 + $0x78] sm:$0xff]
    %v48 = vld [vmem:[%s1 + $0x80] sm:$0xff]
    %v49 = vld [vmem:[%s1 + $0x88] sm:$0xff]
    %v50 = vld [vmem:[%s1 + $0x90] sm:$0xff]
    %v51 = vld [vmem:[%s1 + $0x98] sm:$0xff]
    %v52 = vld [vmem:[%s1 + $0xa0] sm:$0xff]
    %v53 = vld [vmem:[%s1 + $0xa8] sm:$0xff]
    %v54 = vld [vmem:[%s1 + $0xb0] sm:$0xff]
    %v55 = vld [vmem:[%s1 + $0xb8] sm:$0xff]
    %v56 = vld [vmem:[%s1 + $0xc0] sm:$0xff]
    %v57 = vld [vmem:[%s1 + $0xc8] sm:$0xff]
    %v58 = vld [vmem:[%s1 + $0xd0] sm:$0xff]
    %v59 = vld [vmem:[%s1 + $0xd8] sm:$0xff]
    %v60 = vld [vmem:[%s1 + $0xe0] sm:$0xff]
    %v61 = vld [vmem:[%s1 + $0xe8] sm:$0xff]
    %v62 = vld [vmem:[%s1 + $0xf0] sm:$0xff]
    %v63 = vld [vmem:[%s1 + $0xf8] sm:$0xff]
    %v64 = vld [vmem:[%s1 + $0x100] sm:$0xff]
    %v65 = vld [vmem:[%s1 + $0x108] sm:$0xff]
    %v66 = vld [vmem:[%s1 + $0x110] sm:$0xff]
    %v67 = vld [vmem:[%s1 + $0x118] sm:$0xff]
    %v68 = vld [vmem:[%s1 + $0x120] sm:$0xff]
    %v69 = vld [vmem:[%s1 + $0x128] sm:$0xff]
    %v70 = vld [vmem:[%s1 + $0x130] sm:$0xff]
    %v71 = vld [vmem:[%s1 + $0x138] sm:$0xff]
    %v72 = vld [vmem:[%s1 + $0x140] sm:$0xff]
    %v73 = vld [vmem:[%s1 + $0x148] sm:$0xff]
    %v74 = vld [vmem:[%s1 + $0x150] sm:$0xff]
    %v75 = vld [vmem:[%s1 + $0x158] sm:$0xff]
    %v76 = vld [vmem:[%s1 + $0x160] sm:$0xff]
    %v77 = vld [vmem:[%s1 + $0x168] sm:$0xff]
    %v78 = vld [vmem:[%s1 + $0x170] sm:$0xff]
    %v79 = vld [vmem:[%s1 + $0x178] sm:$0xff]
    %v80 = vld [vmem:[%s1 + $0x180] sm:$0xff]
    %v81 = vld [vmem:[%s1 + $0x188] sm:$0xff]
    %v82 = vld [vmem:[%s1 + $0x190] sm:$0xff]
    %v83 = vld [vmem:[%s1 + $0x198] sm:$0xff]
    %v84 = vld [vmem:[%s1 + $0x1a0] sm:$0xff]
    %v85 = vld [vmem:[%s1 + $0x1a8] sm:$0xff]
    %v86 = vld [vmem:[%s1 + $0x1b0] sm:$0xff]
    %v87 = vld [vmem:[%s1 + $0x1b8] sm:$0xff]
    %v88 = vld [vmem:[%s1 + $0x1c0] sm:$0xff]
    %v89 = vld [vmem:[%s1 + $0x1c8] sm:$0xff]
    %v90 = vld [vmem:[%s1 + $0x1d0] sm:$0xff]
    %v91 = vld [vmem:[%s1 + $0x1d8] sm:$0xff]
    %v92 = vld [vmem:[%s1 + $0x1e0] sm:$0xff]
    %v93 = vld [vmem:[%s1 + $0x1e8] sm:$0xff]
    %v94 = vld [vmem:[%s1 + $0x1f0] sm:$0xff]
    %v95 = vld [vmem:[%s1 + $0x1f8] sm:$0xff]
    %v96 = vld [vmem:[%s2] sm:$0xf]
    %v98 = vlaneseq
    %v99 = vshrl.u32 %v98, 7
    %v100 = vsub.s32 0, %v99
    %v101 = vrot.slane %v96, %v100
    %v102 = vlaneseq
    %v103 = vshrl.u32 %v102, 7
    %v104 = vsub.s32 1, %v103
    %v105 = vrot.slane %v96, %v104
    %v106 = vlaneseq
    %v107 = vshrl.u32 %v106, 7
    %v108 = vsub.s32 2, %v107
    %v109 = vrot.slane %v96, %v108
    %v110 = vlaneseq
    %v111 = vshrl.u32 %v110, 7
    %v112 = vsub.s32 3, %v111
    %v113 = vrot.slane %v96, %v112
    %v182 = vunpack.c.l.b16 %v32
    %v183 = vunpack.c.h.b16 %v32
    %v184 = vunpack.c.l.b16 %v33
    %v185 = vunpack.c.h.b16 %v33
    %v186 = vunpack.c.l.b16 %v34
    %v187 = vunpack.c.h.b16 %v34
    %v188 = vunpack.c.l.b16 %v35
    %v189 = vunpack.c.h.b16 %v35
    %v190 = vunpack.c.l.b16 %v36
    %v191 = vunpack.c.h.b16 %v36
    %v192 = vunpack.c.l.b16 %v37
    %v193 = vunpack.c.h.b16 %v37
    %v194 = vunpack.c.l.b16 %v38
    %v195 = vunpack.c.h.b16 %v38
    %v196 = vunpack.c.l.b16 %v39
    %v197 = vunpack.c.h.b16 %v39
    %v198 = vunpack.c.l.b16 %v40
    %v199 = vunpack.c.h.b16 %v40
    %v200 = vunpack.c.l.b16 %v41
    %v201 = vunpack.c.h.b16 %v41
    %v202 = vunpack.c.l.b16 %v42
    %v203 = vunpack.c.h.b16 %v42
    %v204 = vunpack.c.l.b16 %v43
    %v205 = vunpack.c.h.b16 %v43
    %v206 = vunpack.c.l.b16 %v44
    %v207 = vunpack.c.h.b16 %v44
    %v208 = vunpack.c.l.b16 %v45
    %v209 = vunpack.c.h.b16 %v45
    %v210 = vunpack.c.l.b16 %v46
    %v211 = vunpack.c.h.b16 %v46
    %v212 = vunpack.c.l.b16 %v47
    %v213 = vunpack.c.h.b16 %v47
    %v214 = vunpack.c.l.b16 %v48
    %v215 = vunpack.c.h.b16 %v48
    %v216 = vunpack.c.l.b16 %v49
    %v217 = vunpack.c.h.b16 %v49
    %v218 = vunpack.c.l.b16 %v50
    %v219 = vunpack.c.h.b16 %v50
    %v220 = vunpack.c.l.b16 %v51
    %v221 = vunpack.c.h.b16 %v51
    %v222 = vunpack.c.l.b16 %v52
    %v223 = vunpack.c.h.b16 %v52
    %v224 = vunpack.c.l.b16 %v53
    %v225 = vunpack.c.h.b16 %v53
    %v226 = vunpack.c.l.b16 %v54
    %v227 = vunpack.c.h.b16 %v54
    %v228 = vunpack.c.l.b16 %v55
    %v229 = vunpack.c.h.b16 %v55
    %v230 = vunpack.c.l.b16 %v56
    %v231 = vunpack.c.h.b16 %v56
    %v232 = vunpack.c.l.b16 %v57
    %v233 = vunpack.c.h.b16 %v57
    %v234 = vunpack.c.l.b16 %v58
    %v235 = vunpack.c.h.b16 %v58
    %v236 = vunpack.c.l.b16 %v59
    %v237 = vunpack.c.h.b16 %v59
    %v238 = vunpack.c.l.b16 %v60
    %v239 = vunpack.c.h.b16 %v60
    %v240 = vunpack.c.l.b16 %v61
    %v241 = vunpack.c.h.b16 %v61
    %v242 = vunpack.c.l.b16 %v62
    %v243 = vunpack.c.h.b16 %v62
    %v244 = vunpack.c.l.b16 %v63
    %v245 = vunpack.c.h.b16 %v63
    %v246 = vunpack.c.l.b16 %v64
    %v247 = vunpack.c.h.b16 %v64
    %v248 = vunpack.c.l.b16 %v65
    %v249 = vunpack.c.h.b16 %v65
    %v250 = vunpack.c.l.b16 %v66
    %v251 = vunpack.c.h.b16 %v66
    %v252 = vunpack.c.l.b16 %v67
    %v253 = vunpack.c.h.b16 %v67
    %v254 = vunpack.c.l.b16 %v68
    %v255 = vunpack.c.h.b16 %v68
    %v256 = vunpack.c.l.b16 %v69
    %v257 = vunpack.c.h.b16 %v69
    %v258 = vunpack.c.l.b16 %v70
    %v259 = vunpack.c.h.b16 %v70
    %v260 = vunpack.c.l.b16 %v71
    %v261 = vunpack.c.h.b16 %v71
    %v262 = vunpack.c.l.b16 %v72
    %v263 = vunpack.c.h.b16 %v72
    %v264 = vunpack.c.l.b16 %v73
    %v265 = vunpack.c.h.b16 %v73
    %v266 = vunpack.c.l.b16 %v74
    %v267 = vunpack.c.h.b16 %v74
    %v268 = vunpack.c.l.b16 %v75
    %v269 = vunpack.c.h.b16 %v75
    %v270 = vunpack.c.l.b16 %v76
    %v271 = vunpack.c.h.b16 %v76
    %v272 = vunpack.c.l.b16 %v77
    %v273 = vunpack.c.h.b16 %v77
    %v274 = vunpack.c.l.b16 %v78
    %v275 = vunpack.c.h.b16 %v78
    %v276 = vunpack.c.l.b16 %v79
    %v277 = vunpack.c.h.b16 %v79
    %v278 = vunpack.c.l.b16 %v80
    %v279 = vunpack.c.h.b16 %v80
    %v280 = vunpack.c.l.b16 %v81
    %v281 = vunpack.c.h.b16 %v81
    %v282 = vunpack.c.l.b16 %v82
    %v283 = vunpack.c.h.b16 %v82
    %v284 = vunpack.c.l.b16 %v83
    %v285 = vunpack.c.h.b16 %v83
    %v286 = vunpack.c.l.b16 %v84
    %v287 = vunpack.c.h.b16 %v84
    %v288 = vunpack.c.l.b16 %v85
    %v289 = vunpack.c.h.b16 %v85
    %v290 = vunpack.c.l.b16 %v86
    %v291 = vunpack.c.h.b16 %v86
    %v292 = vunpack.c.l.b16 %v87
    %v293 = vunpack.c.h.b16 %v87
    %v294 = vunpack.c.l.b16 %v88
    %v295 = vunpack.c.h.b16 %v88
    %v296 = vunpack.c.l.b16 %v89
    %v297 = vunpack.c.h.b16 %v89
    %v298 = vunpack.c.l.b16 %v90
    %v299 = vunpack.c.h.b16 %v90
    %v300 = vunpack.c.l.b16 %v91
    %v301 = vunpack.c.h.b16 %v91
    %v302 = vunpack.c.l.b16 %v92
    %v303 = vunpack.c.h.b16 %v92
    %v304 = vunpack.c.l.b16 %v93
    %v305 = vunpack.c.h.b16 %v93
    %v306 = vunpack.c.l.b16 %v94
    %v307 = vunpack.c.h.b16 %v94
    %v308 = vunpack.c.l.b16 %v95
    %v309 = vunpack.c.h.b16 %v95
    %v310 = vpack.c.b16 %v186, %v182
    %v311 = vpack.c.b16 %v187, %v183
    %v312 = vpack.c.b16 %v188, %v184
    %v313 = vpack.c.b16 %v189, %v185
    %v314 = vpack.c.b16 %v194, %v190
    %v315 = vpack.c.b16 %v195, %v191
    %v316 = vpack.c.b16 %v196, %v192
    %v317 = vpack.c.b16 %v197, %v193
    %v318 = vpack.c.b16 %v202, %v198
    %v319 = vpack.c.b16 %v203, %v199
    %v320 = vpack.c.b16 %v204, %v200
    %v321 = vpack.c.b16 %v205, %v201
    %v322 = vpack.c.b16 %v210, %v206
    %v323 = vpack.c.b16 %v211, %v207
    %v324 = vpack.c.b16 %v212, %v208
    %v325 = vpack.c.b16 %v213, %v209
    %v326 = vpack.c.b16 %v218, %v214
    %v327 = vpack.c.b16 %v219, %v215
    %v328 = vpack.c.b16 %v220, %v216
    %v329 = vpack.c.b16 %v221, %v217
    %v330 = vpack.c.b16 %v226, %v222
    %v331 = vpack.c.b16 %v227, %v223
    %v332 = vpack.c.b16 %v228, %v224
    %v333 = vpack.c.b16 %v229, %v225
    %v334 = vpack.c.b16 %v234, %v230
    %v335 = vpack.c.b16 %v235, %v231
    %v336 = vpack.c.b16 %v236, %v232
    %v337 = vpack.c.b16 %v237, %v233
    %v338 = vpack.c.b16 %v242, %v238
    %v339 = vpack.c.b16 %v243, %v239
    %v340 = vpack.c.b16 %v244, %v240
    %v341 = vpack.c.b16 %v245, %v241
    %v342 = vpack.c.b16 %v250, %v246
    %v343 = vpack.c.b16 %v251, %v247
    %v344 = vpack.c.b16 %v252, %v248
    %v345 = vpack.c.b16 %v253, %v249
    %v346 = vpack.c.b16 %v258, %v254
    %v347 = vpack.c.b16 %v259, %v255
    %v348 = vpack.c.b16 %v260, %v256
    %v349 = vpack.c.b16 %v261, %v257
    %v350 = vpack.c.b16 %v266, %v262
    %v351 = vpack.c.b16 %v267, %v263
    %v352 = vpack.c.b16 %v268, %v264
    %v353 = vpack.c.b16 %v269, %v265
    %v354 = vpack.c.b16 %v274, %v270
    %v355 = vpack.c.b16 %v275, %v271
    %v356 = vpack.c.b16 %v276, %v272
    %v357 = vpack.c.b16 %v277, %v273
    %v358 = vpack.c.b16 %v282, %v278
    %v359 = vpack.c.b16 %v283, %v279
    %v360 = vpack.c.b16 %v284, %v280
    %v361 = vpack.c.b16 %v285, %v281
    %v362 = vpack.c.b16 %v290, %v286
    %v363 = vpack.c.b16 %v291, %v287
    %v364 = vpack.c.b16 %v292, %v288
    %v365 = vpack.c.b16 %v293, %v289
    %v366 = vpack.c.b16 %v298, %v294
    %v367 = vpack.c.b16 %v299, %v295
    %v368 = vpack.c.b16 %v300, %v296
    %v369 = vpack.c.b16 %v301, %v297
    %v370 = vpack.c.b16 %v306, %v302
    %v371 = vpack.c.b16 %v307, %v303
    %v372 = vpack.c.b16 %v308, %v304
    %v373 = vpack.c.b16 %v309, %v305
    %438 = vmatprep.subr.bf16.mxu0 %v311
    %439 = vmatpush1.bf16.msra.mxu0 %v310
    %440 = vmatprep.subr.bf16.mxu0 %v315
    %441 = vmatpush1.bf16.msra.mxu0 %v314
    %442 = vmatprep.subr.bf16.mxu0 %v319
    %443 = vmatpush1.bf16.msra.mxu0 %v318
    %444 = vmatprep.subr.bf16.mxu0 %v323
    %445 = vmatpush1.bf16.msra.mxu0 %v322
    %446 = vmatprep.subr.bf16.mxu0 %v327
    %447 = vmatpush1.bf16.msra.mxu0 %v326
    %448 = vmatprep.subr.bf16.mxu0 %v331
    %449 = vmatpush1.bf16.msra.mxu0 %v330
    %450 = vmatprep.subr.bf16.mxu0 %v335
    %451 = vmatpush1.bf16.msra.mxu0 %v334
    %452 = vmatprep.subr.bf16.mxu0 %v339
    %453 = vmatpush1.bf16.msra.mxu0 %v338
    %454 = vmatprep.subr.bf16.mxu0 %v343
    %455 = vmatpush1.bf16.msra.mxu0 %v342
    %456 = vmatprep.subr.bf16.mxu0 %v347
    %457 = vmatpush1.bf16.msra.mxu0 %v346
    %458 = vmatprep.subr.bf16.mxu0 %v351
    %459 = vmatpush1.bf16.msra.mxu0 %v350
    %460 = vmatprep.subr.bf16.mxu0 %v355
    %461 = vmatpush1.bf16.msra.mxu0 %v354
    %462 = vmatprep.subr.bf16.mxu0 %v359
    %463 = vmatpush1.bf16.msra.mxu0 %v358
    %464 = vmatprep.subr.bf16.mxu0 %v363
    %465 = vmatpush1.bf16.msra.mxu0 %v362
    %466 = vmatprep.subr.bf16.mxu0 %v367
    %467 = vmatpush1.bf16.msra.mxu0 %v366
    %468 = vmatprep.subr.bf16.mxu0 %v371
    %469 = vmatpush1.bf16.msra.mxu0 %v370
    %470 = vmatprep.mubr.bf16.mxu0 %v31
    %471 = vmatmul.mubr.bf16.gmra.mrb[0].mxu0 %v30
    %v472 = vpop.f32.mrb[0].mxu0
    %v473 = vadd.f32 %v101, %v472
    %v474 = vpop.f32.mrb[0].mxu0
    %v475 = vadd.f32 %v105, %v474
    %v476 = vpop.f32.mrb[0].mxu0
    %v477 = vpop.f32.mrb[0].mxu0
    %478 = vdwg.mxu0
    %479 = vmatprep.subr.bf16.mxu0 %v313
    %480 = vmatpush1.bf16.msra.mxu0 %v312
    %481 = vmatprep.subr.bf16.mxu0 %v317
    %482 = vmatpush1.bf16.msra.mxu0 %v316
    %483 = vmatprep.subr.bf16.mxu0 %v321
    %484 = vmatpush1.bf16.msra.mxu0 %v320
    %485 = vmatprep.subr.bf16.mxu0 %v325
    %486 = vmatpush1.bf16.msra.mxu0 %v324
    %487 = vmatprep.subr.bf16.mxu0 %v329
    %488 = vmatpush1.bf16.msra.mxu0 %v328
    %489 = vmatprep.subr.bf16.mxu0 %v333
    %490 = vmatpush1.bf16.msra.mxu0 %v332
    %491 = vmatprep.subr.bf16.mxu0 %v337
    %492 = vmatpush1.bf16.msra.mxu0 %v336
    %493 = vmatprep.subr.bf16.mxu0 %v341
    %494 = vmatpush1.bf16.msra.mxu0 %v340
    %495 = vmatprep.subr.bf16.mxu0 %v345
    %496 = vmatpush1.bf16.msra.mxu0 %v344
    %497 = vmatprep.subr.bf16.mxu0 %v349
    %498 = vmatpush1.bf16.msra.mxu0 %v348
    %499 = vmatprep.subr.bf16.mxu0 %v353
    %500 = vmatpush1.bf16.msra.mxu0 %v352
    %501 = vmatprep.subr.bf16.mxu0 %v357
    %502 = vmatpush1.bf16.msra.mxu0 %v356
    %503 = vmatprep.subr.bf16.mxu0 %v361
    %504 = vmatpush1.bf16.msra.mxu0 %v360
    %505 = vmatprep.subr.bf16.mxu0 %v365
    %506 = vmatpush1.bf16.msra.mxu0 %v364
    %507 = vmatprep.subr.bf16.mxu0 %v369
    %508 = vmatpush1.bf16.msra.mxu0 %v368
    %509 = vmatprep.subr.bf16.mxu0 %v373
    %510 = vmatpush1.bf16.msra.mxu0 %v372
    %511 = vmatprep.mubr.bf16.mxu0 %v31
    %512 = vmatmul.mubr.bf16.gmra.mrb[0].mxu0 %v30
    %v513 = vpop.f32.mrb[0].mxu0
    %v514 = vadd.f32 %v109, %v513
    %v515 = vpop.f32.mrb[0].mxu0
    %v516 = vadd.f32 %v113, %v515
    %v517 = vpop.f32.mrb[0].mxu0
    %v518 = vpop.f32.mrb[0].mxu0
    %519 = vdwg.mxu0
    %v520 = vmax.f32 %v473, 0.0
    %v521 = vmax.f32 %v475, 0.0
    %v522 = vmax.f32 %v514, 0.0
    %v523 = vmax.f32 %v516, 0.0
    %v524 = vpack.c.bf16 %v520, %v520
    %v525 = vpack.c.bf16 %v521, %v521
    %v526 = vpack.c.bf16 %v522, %v522
    %v527 = vpack.c.bf16 %v523, %v523
    %v528 = vld [vmem:[%s3] sm:$0xff]
    %v529 = vld [vmem:[%s3 + $0x8] sm:$0xff]
    %v530 = vld [vmem:[%s3 + $0x10] sm:$0xff]
    %v531 = vld [vmem:[%s3 + $0x18] sm:$0xff]
    %v532 = vld [vmem:[%s3 + $0x20] sm:$0xff]
    %v533 = vld [vmem:[%s3 + $0x28] sm:$0xff]
    %v534 = vld [vmem:[%s3 + $0x30] sm:$0xff]
    %v535 = vld [vmem:[%s3 + $0x38] sm:$0xff]
    %v536 = vld [vmem:[%s3 + $0x40] sm:$0xff]
    %v537 = vld [vmem:[%s3 + $0x48] sm:$0xff]
    %v538 = vld [vmem:[%s3 + $0x50] sm:$0xff]
    %v539 = vld [vmem:[%s3 + $0x58] sm:$0xff]
    %v540 = vld [vmem:[%s3 + $0x60] sm:$0xff]
    %v541 = vld [vmem:[%s3 + $0x68] sm:$0xff]
    %v542 = vld [vmem:[%s3 + $0x70] sm:$0xff]
    %v543 = vld [vmem:[%s3 + $0x78] sm:$0xff]
    %v544 = vld [vmem:[%s3 + $0x80] sm:$0xff]
    %v545 = vld [vmem:[%s3 + $0x88] sm:$0xff]
    %v546 = vld [vmem:[%s3 + $0x90] sm:$0xff]
    %v547 = vld [vmem:[%s3 + $0x98] sm:$0xff]
    %v548 = vld [vmem:[%s3 + $0xa0] sm:$0xff]
    %v549 = vld [vmem:[%s3 + $0xa8] sm:$0xff]
    %v550 = vld [vmem:[%s3 + $0xb0] sm:$0xff]
    %v551 = vld [vmem:[%s3 + $0xb8] sm:$0xff]
    %v552 = vld [vmem:[%s3 + $0xc0] sm:$0xff]
    %v553 = vld [vmem:[%s3 + $0xc8] sm:$0xff]
    %v554 = vld [vmem:[%s3 + $0xd0] sm:$0xff]
    %v555 = vld [vmem:[%s3 + $0xd8] sm:$0xff]
    %v556 = vld [vmem:[%s3 + $0xe0] sm:$0xff]
    %v557 = vld [vmem:[%s3 + $0xe8] sm:$0xff]
    %v558 = vld [vmem:[%s3 + $0xf0] sm:$0xff]
    %v559 = vld [vmem:[%s3 + $0xf8] sm:$0xff]
    %v560 = vld [vmem:[%s3 + $0x100] sm:$0xff]
    %v561 = vld [vmem:[%s3 + $0x108] sm:$0xff]
    %v562 = vld [vmem:[%s3 + $0x110] sm:$0xff]
    %v563 = vld [vmem:[%s3 + $0x118] sm:$0xff]
    %v564 = vld [vmem:[%s3 + $0x120] sm:$0xff]
    %v565 = vld [vmem:[%s3 + $0x128] sm:$0xff]
    %v566 = vld [vmem:[%s3 + $0x130] sm:$0xff]
    %v567 = vld [vmem:[%s3 + $0x138] sm:$0xff]
    %v568 = vld [vmem:[%s3 + $0x140] sm:$0xff]
    %v569 = vld [vmem:[%s3 + $0x148] sm:$0xff]
    %v570 = vld [vmem:[%s3 + $0x150] sm:$0xff]
    %v571 = vld [vmem:[%s3 + $0x158] sm:$0xff]
    %v572 = vld [vmem:[%s3 + $0x160] sm:$0xff]
    %v573 = vld [vmem:[%s3 + $0x168] sm:$0xff]
    %v574 = vld [vmem:[%s3 + $0x170] sm:$0xff]
    %v575 = vld [vmem:[%s3 + $0x178] sm:$0xff]
    %v576 = vld [vmem:[%s3 + $0x180] sm:$0xff]
    %v577 = vld [vmem:[%s3 + $0x188] sm:$0xff]
    %v578 = vld [vmem:[%s3 + $0x190] sm:$0xff]
    %v579 = vld [vmem:[%s3 + $0x198] sm:$0xff]
    %v580 = vld [vmem:[%s3 + $0x1a0] sm:$0xff]
    %v581 = vld [vmem:[%s3 + $0x1a8] sm:$0xff]
    %v582 = vld [vmem:[%s3 + $0x1b0] sm:$0xff]
    %v583 = vld [vmem:[%s3 + $0x1b8] sm:$0xff]
    %v584 = vld [vmem:[%s3 + $0x1c0] sm:$0xff]
    %v585 = vld [vmem:[%s3 + $0x1c8] sm:$0xff]
    %v586 = vld [vmem:[%s3 + $0x1d0] sm:$0xff]
    %v587 = vld [vmem:[%s3 + $0x1d8] sm:$0xff]
    %v588 = vld [vmem:[%s3 + $0x1e0] sm:$0xff]
    %v589 = vld [vmem:[%s3 + $0x1e8] sm:$0xff]
    %v590 = vld [vmem:[%s3 + $0x1f0] sm:$0xff]
    %v591 = vld [vmem:[%s3 + $0x1f8] sm:$0xff]
    %v592 = vld [vmem:[%s4] sm:$0x3]
    %v594 = vlaneseq
    %v595 = vshrl.u32 %v594, 7
    %v596 = vsub.s32 0, %v595
    %v597 = vrot.slane %v592, %v596
    %v598 = vlaneseq
    %v599 = vshrl.u32 %v598, 7
    %v600 = vsub.s32 1, %v599
    %v601 = vrot.slane %v592, %v600
    %v668 = vunpack.c.l.b16 %v528
    %v669 = vunpack.c.h.b16 %v528
    %v670 = vunpack.c.l.b16 %v529
    %v671 = vunpack.c.h.b16 %v529
    %v672 = vunpack.c.l.b16 %v530
    %v673 = vunpack.c.h.b16 %v530
    %v674 = vunpack.c.l.b16 %v531
    %v675 = vunpack.c.h.b16 %v531
    %v676 = vunpack.c.l.b16 %v532
    %v677 = vunpack.c.h.b16 %v532
    %v678 = vunpack.c.l.b16 %v533
    %v679 = vunpack.c.h.b16 %v533
    %v680 = vunpack.c.l.b16 %v534
    %v681 = vunpack.c.h.b16 %v534
    %v682 = vunpack.c.l.b16 %v535
    %v683 = vunpack.c.h.b16 %v535
    %v684 = vunpack.c.l.b16 %v536
    %v685 = vunpack.c.h.b16 %v536
    %v686 = vunpack.c.l.b16 %v537
    %v687 = vunpack.c.h.b16 %v537
    %v688 = vunpack.c.l.b16 %v538
    %v689 = vunpack.c.h.b16 %v538
    %v690 = vunpack.c.l.b16 %v539
    %v691 = vunpack.c.h.b16 %v539
    %v692 = vunpack.c.l.b16 %v540
    %v693 = vunpack.c.h.b16 %v540
    %v694 = vunpack.c.l.b16 %v541
    %v695 = vunpack.c.h.b16 %v541
    %v696 = vunpack.c.l.b16 %v542
    %v697 = vunpack.c.h.b16 %v542
    %v698 = vunpack.c.l.b16 %v543
    %v699 = vunpack.c.h.b16 %v543
    %v700 = vunpack.c.l.b16 %v544
    %v701 = vunpack.c.h.b16 %v544
    %v702 = vunpack.c.l.b16 %v545
    %v703 = vunpack.c.h.b16 %v545
    %v704 = vunpack.c.l.b16 %v546
    %v705 = vunpack.c.h.b16 %v546
    %v706 = vunpack.c.l.b16 %v547
    %v707 = vunpack.c.h.b16 %v547
    %v708 = vunpack.c.l.b16 %v548
    %v709 = vunpack.c.h.b16 %v548
    %v710 = vunpack.c.l.b16 %v549
    %v711 = vunpack.c.h.b16 %v549
    %v712 = vunpack.c.l.b16 %v550
    %v713 = vunpack.c.h.b16 %v550
    %v714 = vunpack.c.l.b16 %v551
    %v715 = vunpack.c.h.b16 %v551
    %v716 = vunpack.c.l.b16 %v552
    %v717 = vunpack.c.h.b16 %v552
    %v718 = vunpack.c.l.b16 %v553
    %v719 = vunpack.c.h.b16 %v553
    %v720 = vunpack.c.l.b16 %v554
    %v721 = vunpack.c.h.b16 %v554
    %v722 = vunpack.c.l.b16 %v555
    %v723 = vunpack.c.h.b16 %v555
    %v724 = vunpack.c.l.b16 %v556
    %v725 = vunpack.c.h.b16 %v556
    %v726 = vunpack.c.l.b16 %v557
    %v727 = vunpack.c.h.b16 %v557
    %v728 = vunpack.c.l.b16 %v558
    %v729 = vunpack.c.h.b16 %v558
    %v730 = vunpack.c.l.b16 %v559
    %v731 = vunpack.c.h.b16 %v559
    %v732 = vunpack.c.l.b16 %v560
    %v733 = vunpack.c.h.b16 %v560
    %v734 = vunpack.c.l.b16 %v561
    %v735 = vunpack.c.h.b16 %v561
    %v736 = vunpack.c.l.b16 %v562
    %v737 = vunpack.c.h.b16 %v562
    %v738 = vunpack.c.l.b16 %v563
    %v739 = vunpack.c.h.b16 %v563
    %v740 = vunpack.c.l.b16 %v564
    %v741 = vunpack.c.h.b16 %v564
    %v742 = vunpack.c.l.b16 %v565
    %v743 = vunpack.c.h.b16 %v565
    %v744 = vunpack.c.l.b16 %v566
    %v745 = vunpack.c.h.b16 %v566
    %v746 = vunpack.c.l.b16 %v567
    %v747 = vunpack.c.h.b16 %v567
    %v748 = vunpack.c.l.b16 %v568
    %v749 = vunpack.c.h.b16 %v568
    %v750 = vunpack.c.l.b16 %v569
    %v751 = vunpack.c.h.b16 %v569
    %v752 = vunpack.c.l.b16 %v570
    %v753 = vunpack.c.h.b16 %v570
    %v754 = vunpack.c.l.b16 %v571
    %v755 = vunpack.c.h.b16 %v571
    %v756 = vunpack.c.l.b16 %v572
    %v757 = vunpack.c.h.b16 %v572
    %v758 = vunpack.c.l.b16 %v573
    %v759 = vunpack.c.h.b16 %v573
    %v760 = vunpack.c.l.b16 %v574
    %v761 = vunpack.c.h.b16 %v574
    %v762 = vunpack.c.l.b16 %v575
    %v763 = vunpack.c.h.b16 %v575
    %v764 = vunpack.c.l.b16 %v576
    %v765 = vunpack.c.h.b16 %v576
    %v766 = vunpack.c.l.b16 %v577
    %v767 = vunpack.c.h.b16 %v577
    %v768 = vunpack.c.l.b16 %v578
    %v769 = vunpack.c.h.b16 %v578
    %v770 = vunpack.c.l.b16 %v579
    %v771 = vunpack.c.h.b16 %v579
    %v772 = vunpack.c.l.b16 %v580
    %v773 = vunpack.c.h.b16 %v580
    %v774 = vunpack.c.l.b16 %v581
    %v775 = vunpack.c.h.b16 %v581
    %v776 = vunpack.c.l.b16 %v582
    %v777 = vunpack.c.h.b16 %v582
    %v778 = vunpack.c.l.b16 %v583
    %v779 = vunpack.c.h.b16 %v583
    %v780 = vunpack.c.l.b16 %v584
    %v781 = vunpack.c.h.b16 %v584
    %v782 = vunpack.c.l.b16 %v585
    %v783 = vunpack.c.h.b16 %v585
    %v784 = vunpack.c.l.b16 %v586
    %v785 = vunpack.c.h.b16 %v586
    %v786 = vunpack.c.l.b16 %v587
    %v787 = vunpack.c.h.b16 %v587
    %v788 = vunpack.c.l.b16 %v588
    %v789 = vunpack.c.h.b16 %v588
    %v790 = vunpack.c.l.b16 %v589
    %v791 = vunpack.c.h.b16 %v589
    %v792 = vunpack.c.l.b16 %v590
    %v793 = vunpack.c.h.b16 %v590
    %v794 = vunpack.c.l.b16 %v591
    %v795 = vunpack.c.h.b16 %v591
    %v796 = vpack.c.b16 %v670, %v668
    %v797 = vpack.c.b16 %v671, %v669
    %v798 = vpack.c.b16 %v674, %v672
    %v799 = vpack.c.b16 %v675, %v673
    %v800 = vpack.c.b16 %v678, %v676
    %v801 = vpack.c.b16 %v679, %v677
    %v802 = vpack.c.b16 %v682, %v680
    %v803 = vpack.c.b16 %v683, %v681
    %v804 = vpack.c.b16 %v686, %v684
    %v805 = vpack.c.b16 %v687, %v685
    %v806 = vpack.c.b16 %v690, %v688
    %v807 = vpack.c.b16 %v691, %v689
    %v808 = vpack.c.b16 %v694, %v692
    %v809 = vpack.c.b16 %v695, %v693
    %v810 = vpack.c.b16 %v698, %v696
    %v811 = vpack.c.b16 %v699, %v697
    %v812 = vpack.c.b16 %v702, %v700
    %v813 = vpack.c.b16 %v703, %v701
    %v814 = vpack.c.b16 %v706, %v704
    %v815 = vpack.c.b16 %v707, %v705
    %v816 = vpack.c.b16 %v710, %v708
    %v817 = vpack.c.b16 %v711, %v709
    %v818 = vpack.c.b16 %v714, %v712
    %v819 = vpack.c.b16 %v715, %v713
    %v820 = vpack.c.b16 %v718, %v716
    %v821 = vpack.c.b16 %v719, %v717
    %v822 = vpack.c.b16 %v722, %v720
    %v823 = vpack.c.b16 %v723, %v721
    %v824 = vpack.c.b16 %v726, %v724
    %v825 = vpack.c.b16 %v727, %v725
    %v826 = vpack.c.b16 %v730, %v728
    %v827 = vpack.c.b16 %v731, %v729
    %v828 = vpack.c.b16 %v734, %v732
    %v829 = vpack.c.b16 %v735, %v733
    %v830 = vpack.c.b16 %v738, %v736
    %v831 = vpack.c.b16 %v739, %v737
    %v832 = vpack.c.b16 %v742, %v740
    %v833 = vpack.c.b16 %v743, %v741
    %v834 = vpack.c.b16 %v746, %v744
    %v835 = vpack.c.b16 %v747, %v745
    %v836 = vpack.c.b16 %v750, %v748
    %v837 = vpack.c.b16 %v751, %v749
    %v838 = vpack.c.b16 %v754, %v752
    %v839 = vpack.c.b16 %v755, %v753
    %v840 = vpack.c.b16 %v758, %v756
    %v841 = vpack.c.b16 %v759, %v757
    %v842 = vpack.c.b16 %v762, %v760
    %v843 = vpack.c.b16 %v763, %v761
    %v844 = vpack.c.b16 %v766, %v764
    %v845 = vpack.c.b16 %v767, %v765
    %v846 = vpack.c.b16 %v770, %v768
    %v847 = vpack.c.b16 %v771, %v769
    %v848 = vpack.c.b16 %v774, %v772
    %v849 = vpack.c.b16 %v775, %v773
    %v850 = vpack.c.b16 %v778, %v776
    %v851 = vpack.c.b16 %v779, %v777
    %v852 = vpack.c.b16 %v782, %v780
    %v853 = vpack.c.b16 %v783, %v781
    %v854 = vpack.c.b16 %v786, %v784
    %v855 = vpack.c.b16 %v787, %v785
    %v856 = vpack.c.b16 %v790, %v788
    %v857 = vpack.c.b16 %v791, %v789
    %v858 = vpack.c.b16 %v794, %v792
    %v859 = vpack.c.b16 %v795, %v793
    %924 = vmatprep.subr.bf16.mxu0 %v797
    %925 = vmatpush1.bf16.msra.mxu0 %v796
    %926 = vmatprep.subr.bf16.mxu0 %v799
    %927 = vmatpush1.bf16.msra.mxu0 %v798
    %928 = vmatprep.subr.bf16.mxu0 %v801
    %929 = vmatpush1.bf16.msra.mxu0 %v800
    %930 = vmatprep.subr.bf16.mxu0 %v803
    %931 = vmatpush1.bf16.msra.mxu0 %v802
    %932 = vmatprep.subr.bf16.mxu0 %v805
    %933 = vmatpush1.bf16.msra.mxu0 %v804
    %934 = vmatprep.subr.bf16.mxu0 %v807
    %935 = vmatpush1.bf16.msra.mxu0 %v806
    %936 = vmatprep.subr.bf16.mxu0 %v809
    %937 = vmatpush1.bf16.msra.mxu0 %v808
    %938 = vmatprep.subr.bf16.mxu0 %v811
    %939 = vmatpush1.bf16.msra.mxu0 %v810
    %940 = vmatprep.subr.bf16.mxu0 %v813
    %941 = vmatpush1.bf16.msra.mxu0 %v812
    %942 = vmatprep.subr.bf16.mxu0 %v815
    %943 = vmatpush1.bf16.msra.mxu0 %v814
    %944 = vmatprep.subr.bf16.mxu0 %v817
    %945 = vmatpush1.bf16.msra.mxu0 %v816
    %946 = vmatprep.subr.bf16.mxu0 %v819
    %947 = vmatpush1.bf16.msra.mxu0 %v818
    %948 = vmatprep.subr.bf16.mxu0 %v821
    %949 = vmatpush1.bf16.msra.mxu0 %v820
    %950 = vmatprep.subr.bf16.mxu0 %v823
    %951 = vmatpush1.bf16.msra.mxu0 %v822
    %952 = vmatprep.subr.bf16.mxu0 %v825
    %953 = vmatpush1.bf16.msra.mxu0 %v824
    %954 = vmatprep.subr.bf16.mxu0 %v827
    %955 = vmatpush1.bf16.msra.mxu0 %v826
    %956 = vmatprep.mubr.bf16.mxu0 %v525
    %957 = vmatmul.mubr.bf16.gmra.mrb[0].mxu0 %v524
    %v958 = vpop.f32.mrb[0].mxu0
    %v959 = vadd.f32 %v597, %v958
    %v960 = vpop.f32.mrb[0].mxu0
    %v961 = vadd.f32 %v601, %v960
    %v962 = vpop.f32.mrb[0].mxu0
    %v963 = vpop.f32.mrb[0].mxu0
    %964 = vdwg.mxu0
    %965 = vmatprep.subr.bf16.mxu0 %v829
    %966 = vmatpush1.bf16.msra.mxu0 %v828
    %967 = vmatprep.subr.bf16.mxu0 %v831
    %968 = vmatpush1.bf16.msra.mxu0 %v830
    %969 = vmatprep.subr.bf16.mxu0 %v833
    %970 = vmatpush1.bf16.msra.mxu0 %v832
    %971 = vmatprep.subr.bf16.mxu0 %v835
    %972 = vmatpush1.bf16.msra.mxu0 %v834
    %973 = vmatprep.subr.bf16.mxu0 %v837
    %974 = vmatpush1.bf16.msra.mxu0 %v836
    %975 = vmatprep.subr.bf16.mxu0 %v839
    %976 = vmatpush1.bf16.msra.mxu0 %v838
    %977 = vmatprep.subr.bf16.mxu0 %v841
    %978 = vmatpush1.bf16.msra.mxu0 %v840
    %979 = vmatprep.subr.bf16.mxu0 %v843
    %980 = vmatpush1.bf16.msra.mxu0 %v842
    %981 = vmatprep.subr.bf16.mxu0 %v845
    %982 = vmatpush1.bf16.msra.mxu0 %v844
    %983 = vmatprep.subr.bf16.mxu0 %v847
    %984 = vmatpush1.bf16.msra.mxu0 %v846
    %985 = vmatprep.subr.bf16.mxu0 %v849
    %986 = vmatpush1.bf16.msra.mxu0 %v848
    %987 = vmatprep.subr.bf16.mxu0 %v851
    %988 = vmatpush1.bf16.msra.mxu0 %v850
    %989 = vmatprep.subr.bf16.mxu0 %v853
    %990 = vmatpush1.bf16.msra.mxu0 %v852
    %991 = vmatprep.subr.bf16.mxu0 %v855
    %992 = vmatpush1.bf16.msra.mxu0 %v854
    %993 = vmatprep.subr.bf16.mxu0 %v857
    %994 = vmatpush1.bf16.msra.mxu0 %v856
    %995 = vmatprep.subr.bf16.mxu0 %v859
    %996 = vmatpush1.bf16.msra.mxu0 %v858
    %997 = vmatprep.mubr.bf16.mxu0 %v527
    %998 = vmatmul.mubr.bf16.gmra.mrb[0].mxu0 %v526
    %v999 = vpop.f32.mrb[0].mxu0
    %v1000 = vadd.f32 %v959, %v999
    %v1001 = vpop.f32.mrb[0].mxu0
    %v1002 = vadd.f32 %v961, %v1001
    %v1003 = vpop.f32.mrb[0].mxu0
    %v1004 = vpop.f32.mrb[0].mxu0
    %1005 = vdwg.mxu0
    %v1006 = vmax.f32 %v1000, 0.0
    %v1007 = vmax.f32 %v1002, 0.0
    %v1008 = vpack.c.bf16 %v1006, %v1006
    %v1009 = vpack.c.bf16 %v1007, %v1007
    %v1010 = vld [vmem:[%s5] sm:$0xf]
    %v1011 = vld [vmem:[%s5 + $0x4] sm:$0xf]
    %v1012 = vld [vmem:[%s5 + $0x8] sm:$0xf]
    %v1013 = vld [vmem:[%s5 + $0xc] sm:$0xf]
    %v1014 = vld [vmem:[%s5 + $0x10] sm:$0xf]
    %v1015 = vld [vmem:[%s5 + $0x14] sm:$0xf]
    %v1016 = vld [vmem:[%s5 + $0x18] sm:$0xf]
    %v1017 = vld [vmem:[%s5 + $0x1c] sm:$0xf]
    %v1018 = vld [vmem:[%s5 + $0x20] sm:$0xf]
    %v1019 = vld [vmem:[%s5 + $0x24] sm:$0xf]
    %v1020 = vld [vmem:[%s5 + $0x28] sm:$0xf]
    %v1021 = vld [vmem:[%s5 + $0x2c] sm:$0xf]
    %v1022 = vld [vmem:[%s5 + $0x30] sm:$0xf]
    %v1023 = vld [vmem:[%s5 + $0x34] sm:$0xf]
    %v1024 = vld [vmem:[%s5 + $0x38] sm:$0xf]
    %v1025 = vld [vmem:[%s5 + $0x3c] sm:$0xf]
    %v1026 = vld [vmem:[%s5 + $0x40] sm:$0xf]
    %v1027 = vld [vmem:[%s5 + $0x44] sm:$0xf]
    %v1028 = vld [vmem:[%s5 + $0x48] sm:$0xf]
    %v1029 = vld [vmem:[%s5 + $0x4c] sm:$0xf]
    %v1030 = vld [vmem:[%s5 + $0x50] sm:$0xf]
    %v1031 = vld [vmem:[%s5 + $0x54] sm:$0xf]
    %v1032 = vld [vmem:[%s5 + $0x58] sm:$0xf]
    %v1033 = vld [vmem:[%s5 + $0x5c] sm:$0xf]
    %v1034 = vld [vmem:[%s5 + $0x60] sm:$0xf]
    %v1035 = vld [vmem:[%s5 + $0x64] sm:$0xf]
    %v1036 = vld [vmem:[%s5 + $0x68] sm:$0xf]
    %v1037 = vld [vmem:[%s5 + $0x6c] sm:$0xf]
    %v1038 = vld [vmem:[%s5 + $0x70] sm:$0xf]
    %v1039 = vld [vmem:[%s5 + $0x74] sm:$0xf]
    %v1040 = vld [vmem:[%s5 + $0x78] sm:$0xf]
    %v1041 = vld [vmem:[%s5 + $0x7c] sm:$0xf]
    %v1042 = vld [vmem:[%s6] sm:$0x1]
    %v1044 = vlaneseq
    %v1045 = vshrl.u32 %v1044, 7
    %v1046 = vsub.s32 0, %v1045
    %v1047 = vrot.slane %v1042, %v1046
    %v1081 = vunpack.c.l.b16 %v1010
    %v1082 = vunpack.c.l.b16 %v1011
    %v1083 = vunpack.c.l.b16 %v1012
    %v1084 = vunpack.c.l.b16 %v1013
    %v1085 = vunpack.c.l.b16 %v1014
    %v1086 = vunpack.c.l.b16 %v1015
    %v1087 = vunpack.c.l.b16 %v1016
    %v1088 = vunpack.c.l.b16 %v1017
    %v1089 = vunpack.c.l.b16 %v1018
    %v1090 = vunpack.c.l.b16 %v1019
    %v1091 = vunpack.c.l.b16 %v1020
    %v1092 = vunpack.c.l.b16 %v1021
    %v1093 = vunpack.c.l.b16 %v1022
    %v1094 = vunpack.c.l.b16 %v1023
    %v1095 = vunpack.c.l.b16 %v1024
    %v1096 = vunpack.c.l.b16 %v1025
    %v1097 = vunpack.c.l.b16 %v1026
    %v1098 = vunpack.c.l.b16 %v1027
    %v1099 = vunpack.c.l.b16 %v1028
    %v1100 = vunpack.c.l.b16 %v1029
    %v1101 = vunpack.c.l.b16 %v1030
    %v1102 = vunpack.c.l.b16 %v1031
    %v1103 = vunpack.c.l.b16 %v1032
    %v1104 = vunpack.c.l.b16 %v1033
    %v1105 = vunpack.c.l.b16 %v1034
    %v1106 = vunpack.c.l.b16 %v1035
    %v1107 = vunpack.c.l.b16 %v1036
    %v1108 = vunpack.c.l.b16 %v1037
    %v1109 = vunpack.c.l.b16 %v1038
    %v1110 = vunpack.c.l.b16 %v1039
    %v1111 = vunpack.c.l.b16 %v1040
    %v1112 = vunpack.c.l.b16 %v1041
    %v1113 = vpack.c.b16 %v1082, %v1081
    %v1114 = vpack.c.b16 %v1084, %v1083
    %v1115 = vpack.c.b16 %v1086, %v1085
    %v1116 = vpack.c.b16 %v1088, %v1087
    %v1117 = vpack.c.b16 %v1090, %v1089
    %v1118 = vpack.c.b16 %v1092, %v1091
    %v1119 = vpack.c.b16 %v1094, %v1093
    %v1120 = vpack.c.b16 %v1096, %v1095
    %v1121 = vpack.c.b16 %v1098, %v1097
    %v1122 = vpack.c.b16 %v1100, %v1099
    %v1123 = vpack.c.b16 %v1102, %v1101
    %v1124 = vpack.c.b16 %v1104, %v1103
    %v1125 = vpack.c.b16 %v1106, %v1105
    %v1126 = vpack.c.b16 %v1108, %v1107
    %v1127 = vpack.c.b16 %v1110, %v1109
    %v1128 = vpack.c.b16 %v1112, %v1111
    %1145 = vmatprep.subr.bf16.mxu0 0
    %1146 = vmatpush1.bf16.msra.mxu0 %v1113
    %1147 = vmatprep.subr.bf16.mxu0 0
    %1148 = vmatpush1.bf16.msra.mxu0 %v1114
    %1149 = vmatprep.subr.bf16.mxu0 0
    %1150 = vmatpush1.bf16.msra.mxu0 %v1115
    %1151 = vmatprep.subr.bf16.mxu0 0
    %1152 = vmatpush1.bf16.msra.mxu0 %v1116
    %1153 = vmatprep.subr.bf16.mxu0 0
    %1154 = vmatpush1.bf16.msra.mxu0 %v1117
    %1155 = vmatprep.subr.bf16.mxu0 0
    %1156 = vmatpush1.bf16.msra.mxu0 %v1118
    %1157 = vmatprep.subr.bf16.mxu0 0
    %1158 = vmatpush1.bf16.msra.mxu0 %v1119
    %1159 = vmatprep.subr.bf16.mxu0 0
    %1160 = vmatpush1.bf16.msra.mxu0 %v1120
    %1161 = vmatprep.subr.bf16.mxu0 0
    %1162 = vmatpush1.bf16.msra.mxu0 %v1121
    %1163 = vmatprep.subr.bf16.mxu0 0
    %1164 = vmatpush1.bf16.msra.mxu0 %v1122
    %1165 = vmatprep.subr.bf16.mxu0 0
    %1166 = vmatpush1.bf16.msra.mxu0 %v1123
    %1167 = vmatprep.subr.bf16.mxu0 0
    %1168 = vmatpush1.bf16.msra.mxu0 %v1124
    %1169 = vmatprep.subr.bf16.mxu0 0
    %1170 = vmatpush1.bf16.msra.mxu0 %v1125
    %1171 = vmatprep.subr.bf16.mxu0 0
    %1172 = vmatpush1.bf16.msra.mxu0 %v1126
    %1173 = vmatprep.subr.bf16.mxu0 0
    %1174 = vmatpush1.bf16.msra.mxu0 %v1127
    %1175 = vmatprep.subr.bf16.mxu0 0
    %1176 = vmatpush1.bf16.msra.mxu0 %v1128
    %1177 = vmatprep.mubr.bf16.mxu0 %v1009
    %1178 = vmatmul.mubr.bf16.gmra.mrb[0].mxu0 %v1008
    %v1179 = vpop.f32.mrb[0].mxu0
    %v1180 = vadd.f32 %v1047, %v1179
    %v1181 = vpop.f32.mrb[0].mxu0
    %v1182 = vpop.f32.mrb[0].mxu0
    %v1183 = vpop.f32.mrb[0].mxu0
    %1184 = vdwg.mxu0
    %1185 = vst [vmem:[#allocation2] sm:$0xff] %v1180
    // Predicated region
    $region30: #{neural_net_forward.1} parent=1 // pred_check
      _
    $region31: #{neural_net_forward.1} parent=1 // pred_check_branch
      %1187 = sbr.rel (0) target = $region33
    $region32: #{neural_net_forward.1} parent=1 // pred_region
      %s1189 = ssub.s32 128, 128
      %1190 = vsyncadd [#allocation3], %s1189
      %s1192 = sshll.u32 [#allocation2], 4
      %s1193 = int_to_ptr.vmem [resolvable:$true] %s1192
      %1195 = dma.vmem_to_hbm [thread:$0]  %s1193, 128, %s7, [#allocation3]
    $region33: #{neural_net_forward.1} parent=1 // pred_fallthru
      _
    // Predicated region
    $region34: #{neural_net_forward.1} parent=1 // pred_check
      _
    $region35: #{neural_net_forward.1} parent=1 // pred_check_branch
      %1197 = sbr.rel (0) target = $region37
    $region36: #{neural_net_forward.1} parent=1 // pred_region
      %1198 = dma.done [#allocation3], 128
    $region37: #{neural_net_forward.1} parent=1 // pred_fallthru
      _
    %1199 = vsyncpa [#allocation3], 1

</llo_original>
